<compile_context>
chip_gen: v5e
topology: v5e:2x2
jax: 0.10.0
libtpu: 0.0.40
codegen_flags: <defaults>
</compile_context>

<pallas_src>
import jax
import jax.numpy as jnp
from jax.experimental import pallas as pl
from jax.experimental.pallas import tpu as pltpu

_LANE = 128
_MAX_TILE_BYTES = 4 << 20      # ~4 MiB per streamed tile buffer
_VMEM_LIMIT_BYTES = 32 << 20   # covers 2-3 streams x 2 buffers x 4 MiB tiles


def _round_up(n, m):
    return ((n + m - 1) // m) * m


def _sublane_pack(dtype):
    # Rows per packed vreg tile: (8,128) f32, (16,128) bf16, (32,128) int8/fp8.
    return {4: 8, 2: 16, 1: 32}.get(jnp.dtype(dtype).itemsize, 8)


def _pick_tiles(B, F, dtype):
    """Pick a (tile_b, tile_f) block for a (B, F) elementwise stream."""
    itemsize = jnp.dtype(dtype).itemsize
    pack = _sublane_pack(dtype)
    budget = _MAX_TILE_BYTES // itemsize      # elements per streamed tile
    min_b = B if B < pack else pack           # smallest legal sublane tile

    # Lane axis: full F if a (min_b, F) tile fits the budget, else the largest
    # multiple of 128 that does.
    if min_b * F <= budget:
        tile_f = F
    else:
        tile_f = max(_LANE, (budget // min_b // _LANE) * _LANE)

    # Sublane axis: grow to fill the budget, aligned to the dtype packing
    # (or take the full batch when it fits).
    rows = budget // max(tile_f, 1)
    if rows >= B:
        tile_b = B
    else:
        tile_b = max(pack, (rows // pack) * pack)

    # v7x megacore: if everything landed in a single grid step but the tensor
    # is big enough that idling a TensorCore matters, split one axis so the
    # "parallel" grid has >= 2 steps. No effect on single-TC v5e/v6e.
    if (pl.cdiv(B, tile_b) * pl.cdiv(F, tile_f) < 2
            and B * F * itemsize > (2 << 20)):
        if tile_f > _LANE:
            tile_f = _round_up(pl.cdiv(F, 2), _LANE)
        elif tile_b > pack:
            tile_b = _round_up(pl.cdiv(B, 2), pack)
    return tile_b, tile_f


def _drop_path_kernel(scale_ref, x_ref, o_ref):
    # scale_ref: (tile_b, 1) f32 in VMEM; x_ref/o_ref: (tile_b, tile_f) tiles.
    # Multiply in f32 and cast exactly once (free: kernel is DMA-bound).
    o_ref[...] = (x_ref[...].astype(jnp.float32) * scale_ref[...]).astype(o_ref.dtype)


def _drop_path_add_kernel(scale_ref, x_ref, res_ref, o_ref):
    # Fused residual variant: out = shortcut + x * scale (halves HBM traffic
    # versus DropPath followed by a separate add).
    o_ref[...] = (res_ref[...].astype(jnp.float32)
                  + x_ref[...].astype(jnp.float32) * scale_ref[...]
                  ).astype(o_ref.dtype)


def _build_call(B, F, dtype, *, fused, donate_x):
    tile_b, tile_f = _pick_tiles(B, F, dtype)
    grid = (pl.cdiv(B, tile_b), pl.cdiv(F, tile_f))
    itemsize = jnp.dtype(dtype).itemsize

    data_spec = pl.BlockSpec((tile_b, tile_f), lambda b, f: (b, f))
    scale_spec = pl.BlockSpec((tile_b, 1), lambda b, f: (b, 0))

    n_data = 2 if fused else 1
    kernel = _drop_path_add_kernel if fused else _drop_path_kernel
    # x is call-arg index 1; only alias it when the caller explicitly donates x
    # (unsafe otherwise: the input buffer may be reused for the output).
    aliases = {1: 0} if donate_x else {}

    return pl.pallas_call(
        kernel,
        out_shape=jax.ShapeDtypeStruct((B, F), dtype),
        grid=grid,
        in_specs=[scale_spec] + [data_spec] * n_data,
        out_specs=data_spec,
        input_output_aliases=aliases,
        compiler_params=pltpu.CompilerParams(
            # Both axes independent -> shard across v7x's two TensorCores.
            dimension_semantics=("parallel", "parallel"),
            vmem_limit_bytes=_VMEM_LIMIT_BYTES,
        ),
        cost_estimate=pl.CostEstimate(
            flops=(2 if fused else 1) * B * F,
            transcendentals=0,
            bytes_accessed=(n_data + 1) * B * F * itemsize + B * 4,
        ),
    )


def _per_sample_scale(key, B, keep_prob):
    # mask = floor(keep_prob + U[0,1)) in {0,1};  scale = mask / keep_prob
    u = jax.random.uniform(key, (B,), dtype=jnp.float32)
    return (jnp.floor(keep_prob + u) * (1.0 / keep_prob)).reshape(B, 1)


def _check_args(drop_prob, key):
    if not (0.0 <= drop_prob < 1.0):
        # keep_prob == 0 would produce inf/NaN (same failure mode as PyTorch).
        raise ValueError(f"drop_prob must be in [0, 1) when training; got {drop_prob}")
    if key is None:
        raise ValueError("key required when training with drop_prob > 0")


def drop_path_pallas(x, drop_prob=0.0, training=False, *, key=None, donate_x=False):
    """Pallas implementation of per-sample stochastic depth (DropPath)."""
    if drop_prob is None:
        drop_prob = 0.0
    if drop_prob == 0.0 or not training:
        return x
    _check_args(drop_prob, key)
    keep_prob = 1.0 - float(drop_prob)

    orig_shape = x.shape
    B = x.shape[0]
    F = 1
    for d in x.shape[1:]:
        F *= d

    scale = _per_sample_scale(key, B, keep_prob)
    call = _build_call(B, F, x.dtype, fused=False, donate_x=donate_x)
    out = call(scale, x.reshape(B, F))
    return out.reshape(orig_shape)


def drop_path_add_pallas(shortcut, x, drop_prob=0.0, training=False, *, key=None):
    """Fused residual variant: returns shortcut + drop_path(x)."""
    if drop_prob is None:
        drop_prob = 0.0
    if shortcut.shape != x.shape or shortcut.dtype != x.dtype:
        raise ValueError("shortcut and x must have identical shape and dtype")
    if drop_prob == 0.0 or not training:
        return shortcut + x
    _check_args(drop_prob, key)
    keep_prob = 1.0 - float(drop_prob)

    orig_shape = x.shape
    B = x.shape[0]
    F = 1
    for d in x.shape[1:]:
        F *= d

    scale = _per_sample_scale(key, B, keep_prob)
    call = _build_call(B, F, x.dtype, fused=True, donate_x=False)
    out = call(scale, x.reshape(B, F), shortcut.reshape(B, F))
    return out.reshape(orig_shape)


class DropPath:
    """Thin module-like wrapper mirroring the PyTorch DropPath class."""

    def __init__(self, drop_prob=None):
        self.drop_prob = drop_prob
        self.training = True

    def __call__(self, x, *, key=None):
        return drop_path_pallas(x, self.drop_prob or 0.0, self.training, key=key)


def drop_path_ref(x, u, drop_prob):
    """Pure-JAX reference matching the PyTorch semantics (same randoms u)."""
    keep_prob = 1.0 - drop_prob
    mask = jnp.floor(keep_prob + u).reshape((x.shape[0],) + (1,) * (x.ndim - 1))
    return x / keep_prob * mask


if __name__ == "__main__":
    key = jax.random.PRNGKey(0)
    k_x, k_mask, k_res = jax.random.split(key, 3)

    drop_prob = 0.2
    B, C, H, W = 2, 4, 16, 16
    x = jax.random.normal(k_x, (B, C, H, W), dtype=jnp.float32)
    u = jax.random.uniform(k_mask, (B,), dtype=jnp.float32)

    # 1) Training mode, 128-divisible feature size.
    out = jax.block_until_ready(
        drop_path_pallas(x, drop_prob=drop_prob, training=True, key=k_mask))
    ref = drop_path_ref(x, u, drop_prob)
    assert out.shape == x.shape and out.dtype == x.dtype
    assert jnp.allclose(out, ref, atol=1e-5, rtol=1e-5)

    # 2) Feature size not divisible by 128 (full-F lane block, no pad/slice passes).
    x2 = jax.random.normal(k_x, (2, 3, 5, 7), dtype=jnp.float32)
    out2 = jax.block_until_ready(
        drop_path_pallas(x2, drop_prob=drop_prob, training=True, key=k_mask))
    ref2 = drop_path_ref(x2, u, drop_prob)
    assert jnp.allclose(out2, ref2, atol=1e-5, rtol=1e-5)

    # 3) Larger non-divisible F exercising the >=2-step grid and masked boundary block.
    x3 = jax.random.normal(k_x, (2, 3, 300, 300), dtype=jnp.float32)
    out3 = jax.block_until_ready(
        drop_path_pallas(x3, drop_prob=drop_prob, training=True, key=k_mask))
    ref3 = drop_path_ref(x3, u, drop_prob)
    assert jnp.allclose(out3, ref3, atol=1e-5, rtol=1e-5)

    # 4) bf16 input: product computed in f32, cast once.
    xb = x.astype(jnp.bfloat16)
    outb = jax.block_until_ready(
        drop_path_pallas(xb, drop_prob=drop_prob, training=True, key=k_mask))
    scale = _per_sample_scale(k_mask, B, 1.0 - drop_prob).reshape(B, 1, 1, 1)
    refb = xb.astype(jnp.float32) * scale
    assert outb.dtype == jnp.bfloat16
    assert jnp.allclose(outb.astype(jnp.float32), refb, atol=1e-2, rtol=1e-2)

    # 5) Fused residual variant: out = shortcut + drop_path(x).
    res = jax.random.normal(k_res, (B, C, H, W), dtype=jnp.float32)
    outf = jax.block_until_ready(
        drop_path_add_pallas(res, x, drop_prob=drop_prob, training=True, key=k_mask))
    assert jnp.allclose(outf, res + ref, atol=1e-5, rtol=1e-5)

    # 6) Eval mode / drop_prob=0: identity passthrough.
    out_eval = drop_path_pallas(x, drop_prob=drop_prob, training=False)
    assert jnp.array_equal(out_eval, x)
    out_zero = drop_path_pallas(x, drop_prob=0.0, training=True, key=k_mask)
    assert jnp.array_equal(out_zero, x)

    print("KERNEL_OK")
</pallas_src>

<mosaic_0001>
module attributes {stable_mosaic.version = 11 : i64} {
  func.func @_drop_path_kernel(%arg0: i32, %arg1: i32, %arg2: memref<2x1xf32, #tpu.memory_space<vmem>>, %arg3: memref<2x1024xf32, #tpu.memory_space<vmem>>, %arg4: memref<2x1024xf32, #tpu.memory_space<vmem>>) attributes {dimension_semantics = [#tpu.dimension_semantics<parallel>, #tpu.dimension_semantics<parallel>], iteration_bounds = array<i64: 1, 1>, scalar_prefetch = 0 : i64, scratch_operands = 0 : i64, tpu.core_type = #tpu.core_type<tc>, window_params = [{transform_indices = @transform_0, window_bounds = array<i64: 2, 1>}, {transform_indices = @transform_1, window_bounds = array<i64: 2, 1024>}, {transform_indices = @transform_2, window_bounds = array<i64: 2, 1024>}]} {
    %c0 = arith.constant 0 : index
    %c0_0 = arith.constant 0 : index
    %0 = vector.load %arg3[%c0, %c0_0] : memref<2x1024xf32, #tpu.memory_space<vmem>>, vector<2x1024xf32>
    %c0_1 = arith.constant 0 : index
    %c0_2 = arith.constant 0 : index
    %1 = vector.load %arg2[%c0_1, %c0_2] : memref<2x1xf32, #tpu.memory_space<vmem>>, vector<2x1xf32>
    %2 = vector.broadcast %1 : vector<2x1xf32> to vector<2x1024xf32>
    %3 = arith.mulf %0, %2 : vector<2x1024xf32>
    %c0_3 = arith.constant 0 : index
    %c0_4 = arith.constant 0 : index
    %4 = vector.load %arg4[%c0_3, %c0_4] : memref<2x1024xf32, #tpu.memory_space<vmem>>, vector<2x1024xf32>
    tpu.vector_store %arg4[%c0_3, %c0_4], %3 {strides = array<i32>} : memref<2x1024xf32, #tpu.memory_space<vmem>>, vector<2x1024xf32>,
    return
  }
  func.func @transform_0(%arg0: i32, %arg1: i32) -> (i32, i32) {
    %c0_i32 = arith.constant 0 : i32
    %c0_i32_0 = arith.constant 0 : i32
    return %arg0, %c0_i32 : i32, i32
  }
  func.func @transform_1(%arg0: i32, %arg1: i32) -> (i32, i32) {
    %c0_i32 = arith.constant 0 : i32
    return %arg0, %arg1 : i32, i32
  }
  func.func @transform_2(%arg0: i32, %arg1: i32) -> (i32, i32) {
    %c0_i32 = arith.constant 0 : i32
    return %arg0, %arg1 : i32, i32
  }
}

</mosaic_0001>

<llo_original>
// kernel: tpu_custom_call.1
$region0: #{tpu_custom_call.1}
  #allocation0 [shape = 'u32[]', space=smem, size = 0x4, offset = 0x4, fixed_abs, tag = 'smem constant byte address 0x4 - core index']
  #allocation1 [shape = 'u32[72,128]{1,0:T(1,128)}', space=vmem, size = 0x9000, scoped, tag = 'internal scratch']
  %s0 = inlined_call_operand.vmem [shape: f32[2,1], index: 0, kind: input, shape index: {}]
  %s1 = inlined_call_operand.hbm [shape: f32[2,1024], index: 1, kind: input, shape index: {}]
  %s2 = inlined_call_operand.hbm [shape: f32[2,1024], index: 2, kind: output, shape index: {}]
  %s3 = sld [smem:[#allocation0]]
  $region22: #{tpu_custom_call.1} parent=0
    _
  %s5 = ssub.s32 1, %s3
  %s6 = scalar_select 0, %s5, %s3
  $region1: #{tpu_custom_call.1} parent=0
    #allocation2 [shape = 'u8[8192]{0}', space=vmem, size = 0x2000, scoped, tag = 'input window, operand 1, single buffered']
    #allocation3 [shape = 's32[1]{0}', space=sflag, size = 0x4, scoped, tag = 'scoped memory for tpu_custom_call.1']
    #allocation4 [shape = 's32[1]{0}', space=sflag, size = 0x4, scoped, tag = 'scoped memory for tpu_custom_call.1']
    #allocation5 [shape = 'u8[8192]{0}', space=vmem, size = 0x2000, scoped, tag = 'output window, operand 0, single buffered']
    %7 = vsyncpa [#allocation3], 0
    %8 = vsyncpa [#allocation4], 0
    // Predicated region
    $region2: #{tpu_custom_call.1} parent=1 // pred_check
      _
    $region3: #{tpu_custom_call.1} parent=1 // pred_check_branch
      %10 = sbr.rel (0) target = $region5
    $region4: #{tpu_custom_call.1} parent=1 // pred_region
      _
    $region5: #{tpu_custom_call.1} parent=1 // pred_fallthru
      _
    // Predicated region
    $region6: #{tpu_custom_call.1} parent=1 // pred_check
      _
    $region7: #{tpu_custom_call.1} parent=1 // pred_check_branch
      %12 = sbr.rel (0) target = $region9
    $region8: #{tpu_custom_call.1} parent=1 // pred_region
      %14 = vsyncadd [#allocation3], 0
      %s16 = sshll.u32 %s1, 4
      %s17 = int_to_ptr.hbm [resolvable:$true] %s16
      %s18 = sshll.u32 [#allocation2], 4
      %s19 = int_to_ptr.vmem [resolvable:$true] %s18
      %21 = dma.hbm_to_vmem [thread:$0]  %s17, 256, %s19, [#allocation3]
    $region9: #{tpu_custom_call.1} parent=1 // pred_fallthru
      _
    // Predicated region
    $region10: #{tpu_custom_call.1} parent=1 // pred_check
      _
    $region11: #{tpu_custom_call.1} parent=1 // pred_check_branch
      %23 = sbr.rel (0) target = $region13
    $region12: #{tpu_custom_call.1} parent=1 // pred_region
      %25 = dma.done [#allocation3], 256
    $region13: #{tpu_custom_call.1} parent=1 // pred_fallthru
      _
    %v26 = vld [vmem:[#allocation2] sm:$0xff]
    %v27 = vld [vmem:[#allocation2 + $0x8] sm:$0xff]
    %v28 = vld [vmem:[%s0] sm:$0x3]
    %30 = vset.pattern.permute.xlu0 0
    %31 = vperm.xlu0 %30, %v28
    %v32 = vpop.permute.xlu0 %31
    %v34 = vunpack.c.l.s4 269488144
    %v35 = vunpack.c.0.s8 %v34
    %v36 = vperm.slane %v32, %v35
    %v38 = vmul.f32 %v26, %v36
    %v39 = vmul.f32 %v27, %v36
    %40 = vst [vmem:[#allocation5] sm:$0xff] %v38
    %41 = vst [vmem:[#allocation5 + $0x8] sm:$0xff] %v39
    // Predicated region
    $region14: #{tpu_custom_call.1} parent=1 // pred_check
      _
    $region15: #{tpu_custom_call.1} parent=1 // pred_check_branch
      %43 = sbr.rel (0) target = $region17
    $region16: #{tpu_custom_call.1} parent=1 // pred_region
      %45 = vsyncadd [#allocation4], 0
      %s47 = sshll.u32 [#allocation5], 4
      %s48 = int_to_ptr.vmem [resolvable:$true] %s47
      %s49 = sshll.u32 %s2, 4
      %s50 = int_to_ptr.hbm [resolvable:$true] %s49
      %52 = dma.vmem_to_hbm [thread:$0]  %s48, 256, %s50, [#allocation4]
    $region17: #{tpu_custom_call.1} parent=1 // pred_fallthru
      _
    // Predicated region
    $region18: #{tpu_custom_call.1} parent=1 // pred_check
      _
    $region19: #{tpu_custom_call.1} parent=1 // pred_check_branch
      %54 = sbr.rel (0) target = $region21
    $region20: #{tpu_custom_call.1} parent=1 // pred_region
      %56 = dma.done [#allocation4], 256
    $region21: #{tpu_custom_call.1} parent=1 // pred_fallthru
      _
    %57 = vsyncpa [#allocation3], 1
    %58 = vsyncpa [#allocation4], 1

</llo_original>
